<compile_context>
chip_gen: v5e
topology: v5e:2x2
jax: 0.10.0
libtpu: 0.0.40
codegen_flags: <defaults>
</compile_context>

<pallas_src>
import functools

import jax
import jax.numpy as jnp
from jax.experimental import pallas as pl
from jax.experimental.pallas import tpu as pltpu

_LANE = 128
# Conservative scoped-VMEM budget: fine on v5e/v6e (128 MiB physical) and
# v7x (64 MiB physical, 32 MiB default scoped).
_VMEM_BUDGET = 32 * 1024 * 1024


def _skip_connect_kernel(*refs, row_offsets):
    """Fused concat + Linear + ReLU.

    refs = (x0_ref, x1_ref, ..., w_ref, b_ref, o_ref)
    row_offsets: static Python ints, cumulative row offsets into the weight
    tile for each input stream (concat is folded into the matmul).
    """
    *x_refs, w_ref, b_ref, o_ref = refs

    acc = None
    for x_ref, start, stop in zip(x_refs, row_offsets[:-1], row_offsets[1:]):
        # Static slice of the resident weight tile -> zero-cost ref view.
        part = jnp.dot(x_ref[...], w_ref[start:stop, :],
                       preferred_element_type=jnp.float32)
        acc = part if acc is None else acc + part

    acc = acc + b_ref[...]                  # (1, Cout_pad) broadcasts over rows
    o_ref[...] = jnp.maximum(acc, 0.0).astype(o_ref.dtype)


def _pick_tile_m(n, c_in, c_out_pad, dtype_bytes, budget_bytes):
    """Largest row tile whose double-buffered tiles + resident weights fit."""
    # BlockSpec double-buffers every operand, so count the (small) weight/bias
    # tiles twice as well.
    w_bytes = 2 * (c_in + 1) * c_out_pad * 4
    tm = 16
    for cand in (8192, 4096, 2048, 1024, 512, 256, 128, 64, 32, 16):
        tile_bytes = 2 * cand * (c_in * dtype_bytes + c_out_pad * dtype_bytes)
        if tile_bytes + w_bytes <= budget_bytes:
            tm = cand
            break
    if n <= tm:
        return n          # single tile; block equals full array dim -> legal
    return tm             # multiple of 16 -> sublane aligned for f32 and bf16


def skip_connect_forward(xs, pos, batch, params, point2curveidx=None,
                         *, vmem_budget_bytes=_VMEM_BUDGET):
    """Pallas implementation of SkipConnect.forward.

    xs: tuple/list of [N, Ci] feature tensors (concatenated along dim=1).
    pos / batch / point2curveidx: passed through untouched.
    params: dict with 'w' of shape [sum(Ci), Cout] and 'b' of shape [Cout].
    """
    xs = tuple(xs)
    n = xs[0].shape[0]
    cs = [int(x.shape[1]) for x in xs]
    c_in = sum(cs)

    w, b = params["w"], params["b"]
    cout = w.shape[1]

    dtype = xs[0].dtype
    dbytes = jnp.dtype(dtype).itemsize

    # Lane-dense output: pad Cout up to a multiple of 128 so the output store
    # is an unmasked full-lane vst; slice the padding off afterwards.
    cout_pad = ((cout + _LANE - 1) // _LANE) * _LANE
    if cout_pad != cout:
        w = jnp.pad(w, ((0, 0), (0, cout_pad - cout)))
        b = jnp.pad(b, (0, cout_pad - cout))
    w = w.astype(dtype)
    b2d = b.reshape(1, cout_pad).astype(jnp.float32)   # added to f32 accumulator

    # Leave ~25% VMEM headroom for compiler scratch / pipeline bookkeeping.
    tm = _pick_tile_m(n, c_in, cout_pad, dbytes, vmem_budget_bytes * 3 // 4)
    grid = (pl.cdiv(n, tm),)

    cost = pl.CostEstimate(
        flops=2 * n * c_in * cout_pad,
        bytes_accessed=(dbytes * n * (c_in + cout_pad)
                        + dbytes * c_in * cout_pad + 4 * cout_pad),
        transcendentals=0,
    )

    # Cumulative row offsets of each stream inside the stacked weight tile.
    row_offsets = [0]
    for c in cs:
        row_offsets.append(row_offsets[-1] + c)
    kernel = functools.partial(_skip_connect_kernel,
                               row_offsets=tuple(row_offsets))

    in_specs = [pl.BlockSpec((tm, c), lambda i: (i, 0)) for c in cs]
    in_specs.append(pl.BlockSpec((c_in, cout_pad), lambda i: (0, 0)))
    in_specs.append(pl.BlockSpec((1, cout_pad), lambda i: (0, 0)))

    out = pl.pallas_call(
        kernel,
        out_shape=jax.ShapeDtypeStruct((n, cout_pad), dtype),
        grid_spec=pltpu.PrefetchScalarGridSpec(
            num_scalar_prefetch=0,
            grid=grid,
            in_specs=in_specs,
            out_specs=pl.BlockSpec((tm, cout_pad), lambda i: (i, 0)),
        ),
        compiler_params=pltpu.CompilerParams(
            dimension_semantics=("parallel",),
            vmem_limit_bytes=vmem_budget_bytes),
        cost_estimate=cost,
    )(*xs, w, b2d)

    if cout_pad != cout:
        out = out[:, :cout]

    return (out, pos, batch, point2curveidx)


if __name__ == "__main__":
    key = jax.random.PRNGKey(0)
    k1, k2, k3, k4, k5 = jax.random.split(key, 5)

    # Small point-cloud-like shapes: N points, two skip feature streams.
    N, C1, C2, COUT = 128, 32, 32, 64

    x1 = jax.random.normal(k1, (N, C1), dtype=jnp.float32)
    x2 = jax.random.normal(k2, (N, C2), dtype=jnp.float32)
    pos = jax.random.normal(k3, (N, 3), dtype=jnp.float32)
    batch = jnp.zeros((N,), dtype=jnp.int32)

    # Deterministic parameter init for the wrapped nn (Linear + ReLU).
    w = jax.random.normal(k4, (C1 + C2, COUT), dtype=jnp.float32) * 0.05
    b = jax.random.normal(k5, (COUT,), dtype=jnp.float32) * 0.01
    params = {"w": w, "b": b}

    out, pos_o, batch_o, p2c = skip_connect_forward((x1, x2), pos, batch,
                                                    params)
    jax.block_until_ready(out)

    # Pure-JAX reference: explicit concat + linear + relu.
    ref = jnp.maximum(jnp.concatenate([x1, x2], axis=1) @ w + b, 0.0)
    assert out.shape == ref.shape
    assert jnp.allclose(out, ref, atol=1e-5, rtol=1e-5)
    assert pos_o is pos and batch_o is batch and p2c is None

    print("KERNEL_OK")
</pallas_src>

<mosaic_0001>
module attributes {stable_mosaic.version = 11 : i64} {
  func.func @_skip_connect_kernel(%arg0: i32, %arg1: memref<128x32xf32, #tpu.memory_space<vmem>>, %arg2: memref<128x32xf32, #tpu.memory_space<vmem>>, %arg3: memref<64x128xf32, #tpu.memory_space<vmem>>, %arg4: memref<1x128xf32, #tpu.memory_space<vmem>>, %arg5: memref<128x128xf32, #tpu.memory_space<vmem>>) attributes {dimension_semantics = [#tpu.dimension_semantics<parallel>], iteration_bounds = array<i64: 1>, scalar_prefetch = 0 : i64, scratch_operands = 0 : i64, tpu.core_type = #tpu.core_type<tc>, window_params = [{transform_indices = @transform_0, window_bounds = array<i64: 128, 32>}, {transform_indices = @transform_1, window_bounds = array<i64: 128, 32>}, {pipeline_mode = #tpu.pipeline_mode<synchronous>, transform_indices = @transform_2, window_bounds = array<i64: 64, 128>}, {pipeline_mode = #tpu.pipeline_mode<synchronous>, transform_indices = @transform_3, window_bounds = array<i64: 1, 128>}, {transform_indices = @transform_4, window_bounds = array<i64: 128, 128>}]} {
    %c0 = arith.constant 0 : index
    %c0_0 = arith.constant 0 : index
    %0 = vector.load %arg1[%c0, %c0_0] : memref<128x32xf32, #tpu.memory_space<vmem>>, vector<128x32xf32>
    %c0_1 = arith.constant 0 : index
    %c0_2 = arith.constant 0 : index
    %1 = vector.load %arg3[%c0_1, %c0_2] : memref<64x128xf32, #tpu.memory_space<vmem>>, vector<32x128xf32>
    %cst = arith.constant dense<0.000000e+00> : vector<128x128xf32>
    %2 = tpu.matmul %0, %1, %cst {dimension_numbers = #tpu.dot_dimension_numbers<[1], [0], [0], [1], [0, 0, 1, 1], [], []>} : vector<128x32xf32>, vector<32x128xf32>, vector<128x128xf32> -> vector<128x128xf32>
    %c0_3 = arith.constant 0 : index
    %c0_4 = arith.constant 0 : index
    %3 = vector.load %arg2[%c0_3, %c0_4] : memref<128x32xf32, #tpu.memory_space<vmem>>, vector<128x32xf32>
    %c32 = arith.constant 32 : index
    %c0_5 = arith.constant 0 : index
    %4 = vector.load %arg3[%c32, %c0_5] : memref<64x128xf32, #tpu.memory_space<vmem>>, vector<32x128xf32>
    %cst_6 = arith.constant dense<0.000000e+00> : vector<128x128xf32>
    %5 = tpu.matmul %3, %4, %cst_6 {dimension_numbers = #tpu.dot_dimension_numbers<[1], [0], [0], [1], [0, 0, 1, 1], [], []>} : vector<128x32xf32>, vector<32x128xf32>, vector<128x128xf32> -> vector<128x128xf32>
    %6 = arith.addf %2, %5 : vector<128x128xf32>
    %c0_7 = arith.constant 0 : index
    %c0_8 = arith.constant 0 : index
    %7 = vector.load %arg4[%c0_7, %c0_8] : memref<1x128xf32, #tpu.memory_space<vmem>>, vector<1x128xf32>
    %8 = vector.broadcast %7 : vector<1x128xf32> to vector<128x128xf32>
    %9 = arith.addf %6, %8 : vector<128x128xf32>
    %cst_9 = arith.constant 0.000000e+00 : f32
    %10 = vector.broadcast %cst_9 : f32 to vector<128x128xf32>
    %11 = arith.maximumf %9, %10 : vector<128x128xf32>
    %c0_10 = arith.constant 0 : index
    %c0_11 = arith.constant 0 : index
    %12 = vector.load %arg5[%c0_10, %c0_11] : memref<128x128xf32, #tpu.memory_space<vmem>>, vector<128x128xf32>
    tpu.vector_store %arg5[%c0_10, %c0_11], %11 {strides = array<i32>} : memref<128x128xf32, #tpu.memory_space<vmem>>, vector<128x128xf32>,
    return
  }
  func.func @transform_0(%arg0: i32) -> (i32, i32) {
    %c0_i32 = arith.constant 0 : i32
    %c0_i32_0 = arith.constant 0 : i32
    return %arg0, %c0_i32 : i32, i32
  }
  func.func @transform_1(%arg0: i32) -> (i32, i32) {
    %c0_i32 = arith.constant 0 : i32
    %c0_i32_0 = arith.constant 0 : i32
    return %arg0, %c0_i32 : i32, i32
  }
  func.func @transform_2(%arg0: i32) -> (i32, i32) {
    %c0_i32 = arith.constant 0 : i32
    %c0_i32_0 = arith.constant 0 : i32
    %c0_i32_1 = arith.constant 0 : i32
    return %c0_i32, %c0_i32_0 : i32, i32
  }
  func.func @transform_3(%arg0: i32) -> (i32, i32) {
    %c0_i32 = arith.constant 0 : i32
    %c0_i32_0 = arith.constant 0 : i32
    %c0_i32_1 = arith.constant 0 : i32
    return %c0_i32, %c0_i32_0 : i32, i32
  }
  func.func @transform_4(%arg0: i32) -> (i32, i32) {
    %c0_i32 = arith.constant 0 : i32
    %c0_i32_0 = arith.constant 0 : i32
    return %arg0, %c0_i32 : i32, i32
  }
}

</mosaic_0001>

<llo_original>
// kernel: tpu_custom_call.1
$region0: #{tpu_custom_call.1}
  #allocation0 [shape = 'u32[]', space=smem, size = 0x4, offset = 0x4, fixed_abs, tag = 'smem constant byte address 0x4 - core index']
  #allocation1 [shape = 'u32[72,128]{1,0:T(1,128)}', space=vmem, size = 0x9000, scoped, tag = 'internal scratch']
  %s0 = inlined_call_operand.vmem [shape: f32[128,32], index: 0, kind: input, shape index: {}]
  %s1 = inlined_call_operand.vmem [shape: f32[128,32], index: 1, kind: input, shape index: {}]
  %s2 = inlined_call_operand.vmem [shape: f32[64,128], index: 2, kind: input, shape index: {}]
  %s3 = inlined_call_operand.vmem [shape: f32[1,128], index: 3, kind: input, shape index: {}]
  %s4 = inlined_call_operand.hbm [shape: f32[128,128], index: 4, kind: output, shape index: {}]
  %s5 = sld [smem:[#allocation0]]
  $region26: #{tpu_custom_call.1} parent=0
    _
  %s7 = ssub.s32 1, %s5
  %s8 = scalar_select 0, %s7, %s5
  $region1: #{tpu_custom_call.1} parent=0
    #allocation2 [shape = 'u8[65536]{0}', space=vmem, size = 0x10000, scoped, tag = 'output window, operand 0, single buffered']
    #allocation3 [shape = 's32[1]{0}', space=sflag, size = 0x4, scoped, tag = 'scoped memory for tpu_custom_call.1']
    %9 = vsyncpa [#allocation3], 0
    // Predicated region
    $region2: #{tpu_custom_call.1} parent=1 // pred_check
      _
    $region3: #{tpu_custom_call.1} parent=1 // pred_check_branch
      %11 = sbr.rel (0) target = $region5
    $region4: #{tpu_custom_call.1} parent=1 // pred_region
      _
    $region5: #{tpu_custom_call.1} parent=1 // pred_fallthru
      _
    // Predicated region
    $region6: #{tpu_custom_call.1} parent=1 // pred_check
      _
    $region7: #{tpu_custom_call.1} parent=1 // pred_check_branch
      %13 = sbr.rel (0) target = $region9
    $region8: #{tpu_custom_call.1} parent=1 // pred_region
      _
    $region9: #{tpu_custom_call.1} parent=1 // pred_fallthru
      _
    // Predicated region
    $region10: #{tpu_custom_call.1} parent=1 // pred_check
      _
    $region11: #{tpu_custom_call.1} parent=1 // pred_check_branch
      %15 = sbr.rel (0) target = $region13
    $region12: #{tpu_custom_call.1} parent=1 // pred_region
      _
    $region13: #{tpu_custom_call.1} parent=1 // pred_fallthru
      _
    // Predicated region
    $region14: #{tpu_custom_call.1} parent=1 // pred_check
      _
    $region15: #{tpu_custom_call.1} parent=1 // pred_check_branch
      %17 = sbr.rel (0) target = $region17
    $region16: #{tpu_custom_call.1} parent=1 // pred_region
      _
    $region17: #{tpu_custom_call.1} parent=1 // pred_fallthru
      _
    %v18 = vld [vmem:[%s0] sm:$0xff]
    %v19 = vld [vmem:[%s0 + $0x8] sm:$0xff]
    %v20 = vld [vmem:[%s0 + $0x10] sm:$0xff]
    %v21 = vld [vmem:[%s0 + $0x18] sm:$0xff]
    %v22 = vld [vmem:[%s0 + $0x20] sm:$0xff]
    %v23 = vld [vmem:[%s0 + $0x28] sm:$0xff]
    %v24 = vld [vmem:[%s0 + $0x30] sm:$0xff]
    %v25 = vld [vmem:[%s0 + $0x38] sm:$0xff]
    %v26 = vld [vmem:[%s0 + $0x40] sm:$0xff]
    %v27 = vld [vmem:[%s0 + $0x48] sm:$0xff]
    %v28 = vld [vmem:[%s0 + $0x50] sm:$0xff]
    %v29 = vld [vmem:[%s0 + $0x58] sm:$0xff]
    %v30 = vld [vmem:[%s0 + $0x60] sm:$0xff]
    %v31 = vld [vmem:[%s0 + $0x68] sm:$0xff]
    %v32 = vld [vmem:[%s0 + $0x70] sm:$0xff]
    %v33 = vld [vmem:[%s0 + $0x78] sm:$0xff]
    %v34 = vld [vmem:[%s2] sm:$0xff]
    %v35 = vld [vmem:[%s2 + $0x8] sm:$0xff]
    %v36 = vld [vmem:[%s2 + $0x10] sm:$0xff]
    %v37 = vld [vmem:[%s2 + $0x18] sm:$0xff]
    %v38 = vld [vmem:[%s1] sm:$0xff]
    %v39 = vld [vmem:[%s1 + $0x8] sm:$0xff]
    %v40 = vld [vmem:[%s1 + $0x10] sm:$0xff]
    %v41 = vld [vmem:[%s1 + $0x18] sm:$0xff]
    %v42 = vld [vmem:[%s1 + $0x20] sm:$0xff]
    %v43 = vld [vmem:[%s1 + $0x28] sm:$0xff]
    %v44 = vld [vmem:[%s1 + $0x30] sm:$0xff]
    %v45 = vld [vmem:[%s1 + $0x38] sm:$0xff]
    %v46 = vld [vmem:[%s1 + $0x40] sm:$0xff]
    %v47 = vld [vmem:[%s1 + $0x48] sm:$0xff]
    %v48 = vld [vmem:[%s1 + $0x50] sm:$0xff]
    %v49 = vld [vmem:[%s1 + $0x58] sm:$0xff]
    %v50 = vld [vmem:[%s1 + $0x60] sm:$0xff]
    %v51 = vld [vmem:[%s1 + $0x68] sm:$0xff]
    %v52 = vld [vmem:[%s1 + $0x70] sm:$0xff]
    %v53 = vld [vmem:[%s1 + $0x78] sm:$0xff]
    %v54 = vld [vmem:[%s2 + $0x20] sm:$0xff]
    %v55 = vld [vmem:[%s2 + $0x28] sm:$0xff]
    %v56 = vld [vmem:[%s2 + $0x30] sm:$0xff]
    %v57 = vld [vmem:[%s2 + $0x38] sm:$0xff]
    %vm58 = vcmask 261120
    %v60 = vsel %vm58, %v38, 0
    %v63 = vsel %vm58, %v39, 0
    %v66 = vsel %vm58, %v40, 0
    %v69 = vsel %vm58, %v41, 0
    %v72 = vsel %vm58, %v42, 0
    %v75 = vsel %vm58, %v43, 0
    %v78 = vsel %vm58, %v44, 0
    %v81 = vsel %vm58, %v45, 0
    %v84 = vsel %vm58, %v46, 0
    %v87 = vsel %vm58, %v47, 0
    %v90 = vsel %vm58, %v48, 0
    %v93 = vsel %vm58, %v49, 0
    %v96 = vsel %vm58, %v50, 0
    %v99 = vsel %vm58, %v51, 0
    %v102 = vsel %vm58, %v52, 0
    %v105 = vsel %vm58, %v53, 0
    %107 = vmatpush.msra.mxu0 0.0
    %108 = vmatpush.msra.mxu0 0.0
    %109 = vmatpush.msra.mxu0 0.0
    %110 = vmatpush.msra.mxu0 0.0
    %111 = vmatpush.msra.mxu0 0.0
    %112 = vmatpush.msra.mxu0 0.0
    %113 = vmatpush.msra.mxu0 0.0
    %114 = vmatpush.msra.mxu0 0.0
    %115 = vmatpush.msra.mxu0 0.0
    %116 = vmatpush.msra.mxu0 0.0
    %117 = vmatpush.msra.mxu0 0.0
    %118 = vmatpush.msra.mxu0 0.0
    %119 = vmatpush.msra.mxu0 %v57
    %120 = vmatpush.msra.mxu0 %v56
    %121 = vmatpush.msra.mxu0 %v55
    %122 = vmatpush.msra.mxu0 %v54
    %123 = vmatmul.f32.gmra.mxu0 %v60
    %v124 = vpop.f32.mrf.mxu0
    %v125 = vadd.f32 0.0, %v124
    %126 = vmatmul.f32.gmra.mxu0 %v63
    %v127 = vpop.f32.mrf.mxu0
    %v128 = vadd.f32 0.0, %v127
    %129 = vmatmul.f32.gmra.mxu0 %v66
    %v130 = vpop.f32.mrf.mxu0
    %v131 = vadd.f32 0.0, %v130
    %132 = vmatmul.f32.gmra.mxu0 %v69
    %v133 = vpop.f32.mrf.mxu0
    %v134 = vadd.f32 0.0, %v133
    %135 = vmatmul.f32.gmra.mxu0 %v72
    %v136 = vpop.f32.mrf.mxu0
    %v137 = vadd.f32 0.0, %v136
    %138 = vmatmul.f32.gmra.mxu0 %v75
    %v139 = vpop.f32.mrf.mxu0
    %v140 = vadd.f32 0.0, %v139
    %141 = vmatmul.f32.gmra.mxu0 %v78
    %v142 = vpop.f32.mrf.mxu0
    %v143 = vadd.f32 0.0, %v142
    %144 = vmatmul.f32.gmra.mxu0 %v81
    %v145 = vpop.f32.mrf.mxu0
    %v146 = vadd.f32 0.0, %v145
    %147 = vmatmul.f32.gmra.mxu0 %v84
    %v148 = vpop.f32.mrf.mxu0
    %v149 = vadd.f32 0.0, %v148
    %150 = vmatmul.f32.gmra.mxu0 %v87
    %v151 = vpop.f32.mrf.mxu0
    %v152 = vadd.f32 0.0, %v151
    %153 = vmatmul.f32.gmra.mxu0 %v90
    %v154 = vpop.f32.mrf.mxu0
    %v155 = vadd.f32 0.0, %v154
    %156 = vmatmul.f32.gmra.mxu0 %v93
    %v157 = vpop.f32.mrf.mxu0
    %v158 = vadd.f32 0.0, %v157
    %159 = vmatmul.f32.gmra.mxu0 %v96
    %v160 = vpop.f32.mrf.mxu0
    %v161 = vadd.f32 0.0, %v160
    %162 = vmatmul.f32.gmra.mxu0 %v99
    %v163 = vpop.f32.mrf.mxu0
    %v164 = vadd.f32 0.0, %v163
    %165 = vmatmul.f32.gmra.mxu0 %v102
    %v166 = vpop.f32.mrf.mxu0
    %v167 = vadd.f32 0.0, %v166
    %168 = vmatmul.f32.gmra.mxu0 %v105
    %v169 = vpop.f32.mrf.mxu0
    %v170 = vadd.f32 0.0, %v169
    %171 = vdwg.mxu0
    %v173 = vsel %vm58, %v18, 0
    %v176 = vsel %vm58, %v19, 0
    %v179 = vsel %vm58, %v20, 0
    %v182 = vsel %vm58, %v21, 0
    %v185 = vsel %vm58, %v22, 0
    %v188 = vsel %vm58, %v23, 0
    %v191 = vsel %vm58, %v24, 0
    %v194 = vsel %vm58, %v25, 0
    %v197 = vsel %vm58, %v26, 0
    %v200 = vsel %vm58, %v27, 0
    %v203 = vsel %vm58, %v28, 0
    %v206 = vsel %vm58, %v29, 0
    %v209 = vsel %vm58, %v30, 0
    %v212 = vsel %vm58, %v31, 0
    %v215 = vsel %vm58, %v32, 0
    %v218 = vsel %vm58, %v33, 0
    %220 = vmatpush.msra.mxu0 0.0
    %221 = vmatpush.msra.mxu0 0.0
    %222 = vmatpush.msra.mxu0 0.0
    %223 = vmatpush.msra.mxu0 0.0
    %224 = vmatpush.msra.mxu0 0.0
    %225 = vmatpush.msra.mxu0 0.0
    %226 = vmatpush.msra.mxu0 0.0
    %227 = vmatpush.msra.mxu0 0.0
    %228 = vmatpush.msra.mxu0 0.0
    %229 = vmatpush.msra.mxu0 0.0
    %230 = vmatpush.msra.mxu0 0.0
    %231 = vmatpush.msra.mxu0 0.0
    %232 = vmatpush.msra.mxu0 %v37
    %233 = vmatpush.msra.mxu0 %v36
    %234 = vmatpush.msra.mxu0 %v35
    %235 = vmatpush.msra.mxu0 %v34
    %236 = vmatmul.f32.gmra.mxu0 %v173
    %v237 = vpop.f32.mrf.mxu0
    %v238 = vadd.f32 %v125, %v237
    %239 = vmatmul.f32.gmra.mxu0 %v176
    %v240 = vpop.f32.mrf.mxu0
    %v241 = vadd.f32 %v128, %v240
    %242 = vmatmul.f32.gmra.mxu0 %v179
    %v243 = vpop.f32.mrf.mxu0
    %v244 = vadd.f32 %v131, %v243
    %245 = vmatmul.f32.gmra.mxu0 %v182
    %v246 = vpop.f32.mrf.mxu0
    %v247 = vadd.f32 %v134, %v246
    %248 = vmatmul.f32.gmra.mxu0 %v185
    %v249 = vpop.f32.mrf.mxu0
    %v250 = vadd.f32 %v137, %v249
    %251 = vmatmul.f32.gmra.mxu0 %v188
    %v252 = vpop.f32.mrf.mxu0
    %v253 = vadd.f32 %v140, %v252
    %254 = vmatmul.f32.gmra.mxu0 %v191
    %v255 = vpop.f32.mrf.mxu0
    %v256 = vadd.f32 %v143, %v255
    %257 = vmatmul.f32.gmra.mxu0 %v194
    %v258 = vpop.f32.mrf.mxu0
    %v259 = vadd.f32 %v146, %v258
    %260 = vmatmul.f32.gmra.mxu0 %v197
    %v261 = vpop.f32.mrf.mxu0
    %v262 = vadd.f32 %v149, %v261
    %263 = vmatmul.f32.gmra.mxu0 %v200
    %v264 = vpop.f32.mrf.mxu0
    %v265 = vadd.f32 %v152, %v264
    %266 = vmatmul.f32.gmra.mxu0 %v203
    %v267 = vpop.f32.mrf.mxu0
    %v268 = vadd.f32 %v155, %v267
    %269 = vmatmul.f32.gmra.mxu0 %v206
    %v270 = vpop.f32.mrf.mxu0
    %v271 = vadd.f32 %v158, %v270
    %272 = vmatmul.f32.gmra.mxu0 %v209
    %v273 = vpop.f32.mrf.mxu0
    %v274 = vadd.f32 %v161, %v273
    %275 = vmatmul.f32.gmra.mxu0 %v212
    %v276 = vpop.f32.mrf.mxu0
    %v277 = vadd.f32 %v164, %v276
    %278 = vmatmul.f32.gmra.mxu0 %v215
    %v279 = vpop.f32.mrf.mxu0
    %v280 = vadd.f32 %v167, %v279
    %281 = vmatmul.f32.gmra.mxu0 %v218
    %v282 = vpop.f32.mrf.mxu0
    %v283 = vadd.f32 %v170, %v282
    %284 = vdwg.mxu0
    %v285 = vld [vmem:[%s3] sm:$0x1]
    %v287 = vperm.slane %v285, 0
    %v289 = vadd.f32 %v238, %v287
    %v290 = vadd.f32 %v241, %v287
    %v291 = vadd.f32 %v244, %v287
    %v292 = vadd.f32 %v247, %v287
    %v293 = vadd.f32 %v250, %v287
    %v294 = vadd.f32 %v253, %v287
    %v295 = vadd.f32 %v256, %v287
    %v296 = vadd.f32 %v259, %v287
    %v297 = vadd.f32 %v262, %v287
    %v298 = vadd.f32 %v265, %v287
    %v299 = vadd.f32 %v268, %v287
    %v300 = vadd.f32 %v271, %v287
    %v301 = vadd.f32 %v274, %v287
    %v302 = vadd.f32 %v277, %v287
    %v303 = vadd.f32 %v280, %v287
    %v304 = vadd.f32 %v283, %v287
    %v305 = vmax.f32 %v289, 0.0
    %v306 = vmax.f32 %v290, 0.0
    %v307 = vmax.f32 %v291, 0.0
    %v308 = vmax.f32 %v292, 0.0
    %v309 = vmax.f32 %v293, 0.0
    %v310 = vmax.f32 %v294, 0.0
    %v311 = vmax.f32 %v295, 0.0
    %v312 = vmax.f32 %v296, 0.0
    %v313 = vmax.f32 %v297, 0.0
    %v314 = vmax.f32 %v298, 0.0
    %v315 = vmax.f32 %v299, 0.0
    %v316 = vmax.f32 %v300, 0.0
    %v317 = vmax.f32 %v301, 0.0
    %v318 = vmax.f32 %v302, 0.0
    %v319 = vmax.f32 %v303, 0.0
    %v320 = vmax.f32 %v304, 0.0
    %321 = vst [vmem:[#allocation2] sm:$0xff] %v305
    %322 = vst [vmem:[#allocation2 + $0x8] sm:$0xff] %v306
    %323 = vst [vmem:[#allocation2 + $0x10] sm:$0xff] %v307
    %324 = vst [vmem:[#allocation2 + $0x18] sm:$0xff] %v308
    %325 = vst [vmem:[#allocation2 + $0x20] sm:$0xff] %v309
    %326 = vst [vmem:[#allocation2 + $0x28] sm:$0xff] %v310
    %327 = vst [vmem:[#allocation2 + $0x30] sm:$0xff] %v311
    %328 = vst [vmem:[#allocation2 + $0x38] sm:$0xff] %v312
    %329 = vst [vmem:[#allocation2 + $0x40] sm:$0xff] %v313
    %330 = vst [vmem:[#allocation2 + $0x48] sm:$0xff] %v314
    %331 = vst [vmem:[#allocation2 + $0x50] sm:$0xff] %v315
    %332 = vst [vmem:[#allocation2 + $0x58] sm:$0xff] %v316
    %333 = vst [vmem:[#allocation2 + $0x60] sm:$0xff] %v317
    %334 = vst [vmem:[#allocation2 + $0x68] sm:$0xff] %v318
    %335 = vst [vmem:[#allocation2 + $0x70] sm:$0xff] %v319
    %336 = vst [vmem:[#allocation2 + $0x78] sm:$0xff] %v320
    // Predicated region
    $region18: #{tpu_custom_call.1} parent=1 // pred_check
      _
    $region19: #{tpu_custom_call.1} parent=1 // pred_check_branch
      %338 = sbr.rel (0) target = $region21
    $region20: #{tpu_custom_call.1} parent=1 // pred_region
      %340 = vsyncadd [#allocation3], 0
      %s341 = sshll.u32 [#allocation2], 4
      %s342 = int_to_ptr.vmem [resolvable:$true] %s341
      %s343 = sshll.u32 %s4, 4
      %s344 = int_to_ptr.hbm [resolvable:$true] %s343
      %349 = dma.vmem_to_hbm [thread:$0]  %s342, 2048, %s344, [#allocation3], 128, 128, 8
    $region21: #{tpu_custom_call.1} parent=1 // pred_fallthru
      _
    // Predicated region
    $region22: #{tpu_custom_call.1} parent=1 // pred_check
      _
    $region23: #{tpu_custom_call.1} parent=1 // pred_check_branch
      %351 = sbr.rel (0) target = $region25
    $region24: #{tpu_custom_call.1} parent=1 // pred_region
      %353 = dma.done [#allocation3], 2048
    $region25: #{tpu_custom_call.1} parent=1 // pred_fallthru
      _
    %354 = vsyncpa [#allocation3], 1

</llo_original>
